<compile_context>
chip_gen: v5e
topology: v5e:2x2
jax: 0.10.0
libtpu: 0.0.40
codegen_flags: <defaults>
</compile_context>

<pallas_src>
import functools

import jax
import jax.numpy as jnp
from jax.experimental import pallas as pl
from jax.experimental.pallas import tpu as pltpu

K = 7        # kernel_size of both Conv1d layers
LANE = 128   # TPU lane width


def _fused_doubleconv_kernel(x_ref, w1_ref, w2_ref, o_ref, *, tb, l2_pad):
    # x_ref:  (TB, C_in, L)         bf16, NCL batch tile
    # w1_ref: (C_out, K*C_in + 1)   bf16, k-major flatten, bias folded as last column
    # w2_ref: (C_out, K*C_out + 1)  bf16, k-major flatten, bias folded as last column
    # o_ref:  (TB, C_out, L2_pad)   f32, lane-padded output tile
    _, c_in, L = x_ref.shape
    c_out = w1_ref.shape[0]
    l1 = L - K + 1
    l2 = l1 - K + 1

    x = x_ref[...]  # single load; all windows are value slices of this

    # ---- stage 1: Conv1d(ch_in->ch_out, k=7) + ReLU as one MXU matmul ----
    # im2col rows are k-major (tap-major, channel-minor) to match the weight flatten;
    # batch elements are concatenated along the lane (N) axis.
    rows1 = []
    for k in range(K):
        rows1.append(jnp.concatenate([x[b, :, k:k + l1] for b in range(tb)], axis=1))
    ones1 = jnp.ones((1, tb * l1), dtype=x.dtype)                 # bias row
    win1 = jnp.concatenate(rows1 + [ones1], axis=0)               # (K*C_in+1, TB*L1)
    y1 = jnp.dot(w1_ref[...], win1, preferred_element_type=jnp.float32)
    y1 = jnp.maximum(y1, 0.0).astype(x.dtype)                     # (C_out, TB*L1) bf16, stays on-chip

    # ---- stage 2: Conv1d(ch_out->ch_out, k=7) + ReLU as one MXU matmul ----
    rows2 = []
    for k in range(K):
        rows2.append(jnp.concatenate(
            [y1[:, b * l1 + k:b * l1 + k + l2] for b in range(tb)], axis=1))
    ones2 = jnp.ones((1, tb * l2), dtype=y1.dtype)
    win2 = jnp.concatenate(rows2 + [ones2], axis=0)               # (K*C_out+1, TB*L2)
    y2 = jnp.dot(w2_ref[...], win2, preferred_element_type=jnp.float32)
    y2 = jnp.maximum(y2, 0.0)                                     # (C_out, TB*L2) f32

    # ---- lane-dense store: un-fold batch, pad lanes to L2_pad, write the full block ----
    pad = l2_pad - l2
    planes = []
    for b in range(tb):
        p = y2[:, b * l2:(b + 1) * l2]                            # (C_out, L2)
        if pad:
            p = jnp.concatenate([p, jnp.zeros((c_out, pad), jnp.float32)], axis=1)
        planes.append(p)
    o_ref[...] = jnp.stack(planes, axis=0).astype(o_ref.dtype)    # (TB, C_out, L2_pad)


def _choose_batch_tile(B, L1):
    """Pick TB so one grid step carries ~1K lanes of matmul N; single step for small B."""
    target = 1024
    if B * L1 <= 2 * target:
        return B
    tb = max(1, target // L1)
    while B % tb != 0:
        tb -= 1
    return tb


def doubleconv_37(x_ncl, w1, b1, w2, b2):
    """x_ncl: (B, ch_in, L) NCL; w*: PyTorch layout (C_out, C_in, K); b*: (C_out,).
    Returns (B, ch_out, L - 12) float32, matching the PyTorch module forward."""
    B, C_in, L = x_ncl.shape
    C_out = w1.shape[0]
    L1 = L - K + 1
    L2 = L1 - K + 1
    assert L2 >= 1, "sequence too short for two k=7 convolutions"
    L2_pad = ((L2 + LANE - 1) // LANE) * LANE

    TB = _choose_batch_tile(B, L1)
    assert B % TB == 0
    grid = (B // TB,)

    # k-major weight flatten (w_r[o, k*C + c] = w[o, c, k]) with the bias folded as the
    # last column; pre-cast parameters and activations to bf16 (f32 accumulation in-kernel).
    w1a = jnp.concatenate(
        [jnp.transpose(w1, (0, 2, 1)).reshape(C_out, K * C_in), b1[:, None]], axis=1
    ).astype(jnp.bfloat16)
    w2a = jnp.concatenate(
        [jnp.transpose(w2, (0, 2, 1)).reshape(C_out, K * C_out), b2[:, None]], axis=1
    ).astype(jnp.bfloat16)
    x_bf = x_ncl.astype(jnp.bfloat16)

    flops = 2 * B * (L1 * (K * C_in + 1) * C_out + L2 * (K * C_out + 1) * C_out)
    bytes_accessed = (2 * (x_bf.size + w1a.size + w2a.size)     # bf16 inputs
                      + 4 * B * C_out * L2_pad)                 # f32 padded output

    kernel = functools.partial(_fused_doubleconv_kernel, tb=TB, l2_pad=L2_pad)

    out_pad = pl.pallas_call(
        kernel,
        out_shape=jax.ShapeDtypeStruct((B, C_out, L2_pad), jnp.float32),
        grid=grid,
        in_specs=[
            pl.BlockSpec((TB, C_in, L), lambda i: (i, 0, 0)),          # batch tile, NCL
            pl.BlockSpec((C_out, K * C_in + 1), lambda i: (0, 0)),     # stage-1 weights+bias
            pl.BlockSpec((C_out, K * C_out + 1), lambda i: (0, 0)),    # stage-2 weights+bias
        ],
        out_specs=pl.BlockSpec((TB, C_out, L2_pad), lambda i: (i, 0, 0)),
        compiler_params=pltpu.CompilerParams(dimension_semantics=("parallel",)),
        cost_estimate=pl.CostEstimate(flops=flops, transcendentals=0,
                                      bytes_accessed=bytes_accessed),
    )(x_bf, w1a, w2a)

    return out_pad[:, :, :L2]


def _ref_conv1d_relu(x, w, b):
    # Pure-JAX reference of nn.Conv1d + ReLU: x (B, C_in, L), w (C_out, C_in, K), b (C_out,)
    L_out = x.shape[-1] - K + 1
    cols = jnp.stack([x[:, :, k:k + L_out] for k in range(K)], axis=-1)  # (B, Cin, Lout, K)
    y = jnp.einsum("bclk,ock->bol", cols, w) + b[None, :, None]
    return jnp.maximum(y, 0.0)


if __name__ == "__main__":
    B, ch_in, ch_out, L = 2, 4, 8, 32

    key = jax.random.PRNGKey(0)
    kx, kw1, kb1, kw2, kb2 = jax.random.split(key, 5)

    x = jax.random.normal(kx, (B, ch_in, L), dtype=jnp.float32)
    # PyTorch Conv1d weight layout: (C_out, C_in, K)
    w1 = 0.1 * jax.random.normal(kw1, (ch_out, ch_in, K), dtype=jnp.float32)
    b1 = 0.1 * jax.random.normal(kb1, (ch_out,), dtype=jnp.float32)
    w2 = 0.1 * jax.random.normal(kw2, (ch_out, ch_out, K), dtype=jnp.float32)
    b2 = 0.1 * jax.random.normal(kb2, (ch_out,), dtype=jnp.float32)

    out = jax.block_until_ready(doubleconv_37(x, w1, b1, w2, b2))

    # Sanity check vs a pure-JAX f32 reference of the PyTorch forward.
    # Tolerance loosened because activations/weights are fed to the MXU in bf16
    # (accumulation stays f32).
    ref = _ref_conv1d_relu(_ref_conv1d_relu(x, w1, b1), w2, b2)
    assert out.shape == (B, ch_out, L - 2 * (K - 1)), out.shape
    assert jnp.allclose(out, ref, atol=2e-2, rtol=2e-2), "mismatch vs reference"

    print("KERNEL_OK")
</pallas_src>

<mosaic_0001>
module attributes {stable_mosaic.version = 11 : i64} {
  func.func @_fused_doubleconv_kernel(%arg0: i32, %arg1: memref<2x4x32xbf16, #tpu.memory_space<vmem>>, %arg2: memref<8x29xbf16, #tpu.memory_space<vmem>>, %arg3: memref<8x57xbf16, #tpu.memory_space<vmem>>, %arg4: memref<2x8x128xf32, #tpu.memory_space<vmem>>) attributes {dimension_semantics = [#tpu.dimension_semantics<parallel>], iteration_bounds = array<i64: 1>, scalar_prefetch = 0 : i64, scratch_operands = 0 : i64, tpu.core_type = #tpu.core_type<tc>, window_params = [{transform_indices = @transform_0, window_bounds = array<i64: 2, 4, 32>}, {pipeline_mode = #tpu.pipeline_mode<synchronous>, transform_indices = @transform_1, window_bounds = array<i64: 8, 29>}, {pipeline_mode = #tpu.pipeline_mode<synchronous>, transform_indices = @transform_2, window_bounds = array<i64: 8, 57>}, {transform_indices = @transform_3, window_bounds = array<i64: 2, 8, 128>}]} {
    %c0 = arith.constant 0 : index
    %c0_0 = arith.constant 0 : index
    %c0_1 = arith.constant 0 : index
    %0 = vector.load %arg1[%c0, %c0_0, %c0_1] : memref<2x4x32xbf16, #tpu.memory_space<vmem>>, vector<2x4x32xbf16>
    %1 = vector.extract_strided_slice %0 {offsets = [0, 0, 0], sizes = [1, 4, 26], strides = [1, 1, 1]} : vector<2x4x32xbf16> to vector<1x4x26xbf16>
    %2 = vector.shape_cast %1 : vector<1x4x26xbf16> to vector<4x26xbf16>
    %3 = vector.extract_strided_slice %0 {offsets = [1, 0, 0], sizes = [1, 4, 26], strides = [1, 1, 1]} : vector<2x4x32xbf16> to vector<1x4x26xbf16>
    %4 = vector.shape_cast %3 : vector<1x4x26xbf16> to vector<4x26xbf16>
    %5 = tpu.concatenate %2, %4 in 1 : vector<4x26xbf16>, vector<4x26xbf16> -> vector<4x52xbf16>
    %6 = vector.extract_strided_slice %0 {offsets = [0, 0, 1], sizes = [1, 4, 26], strides = [1, 1, 1]} : vector<2x4x32xbf16> to vector<1x4x26xbf16>
    %7 = vector.shape_cast %6 : vector<1x4x26xbf16> to vector<4x26xbf16>
    %8 = vector.extract_strided_slice %0 {offsets = [1, 0, 1], sizes = [1, 4, 26], strides = [1, 1, 1]} : vector<2x4x32xbf16> to vector<1x4x26xbf16>
    %9 = vector.shape_cast %8 : vector<1x4x26xbf16> to vector<4x26xbf16>
    %10 = tpu.concatenate %7, %9 in 1 : vector<4x26xbf16>, vector<4x26xbf16> -> vector<4x52xbf16>
    %11 = vector.extract_strided_slice %0 {offsets = [0, 0, 2], sizes = [1, 4, 26], strides = [1, 1, 1]} : vector<2x4x32xbf16> to vector<1x4x26xbf16>
    %12 = vector.shape_cast %11 : vector<1x4x26xbf16> to vector<4x26xbf16>
    %13 = vector.extract_strided_slice %0 {offsets = [1, 0, 2], sizes = [1, 4, 26], strides = [1, 1, 1]} : vector<2x4x32xbf16> to vector<1x4x26xbf16>
    %14 = vector.shape_cast %13 : vector<1x4x26xbf16> to vector<4x26xbf16>
    %15 = tpu.concatenate %12, %14 in 1 : vector<4x26xbf16>, vector<4x26xbf16> -> vector<4x52xbf16>
    %16 = vector.extract_strided_slice %0 {offsets = [0, 0, 3], sizes = [1, 4, 26], strides = [1, 1, 1]} : vector<2x4x32xbf16> to vector<1x4x26xbf16>
    %17 = vector.shape_cast %16 : vector<1x4x26xbf16> to vector<4x26xbf16>
    %18 = vector.extract_strided_slice %0 {offsets = [1, 0, 3], sizes = [1, 4, 26], strides = [1, 1, 1]} : vector<2x4x32xbf16> to vector<1x4x26xbf16>
    %19 = vector.shape_cast %18 : vector<1x4x26xbf16> to vector<4x26xbf16>
    %20 = tpu.concatenate %17, %19 in 1 : vector<4x26xbf16>, vector<4x26xbf16> -> vector<4x52xbf16>
    %21 = vector.extract_strided_slice %0 {offsets = [0, 0, 4], sizes = [1, 4, 26], strides = [1, 1, 1]} : vector<2x4x32xbf16> to vector<1x4x26xbf16>
    %22 = vector.shape_cast %21 : vector<1x4x26xbf16> to vector<4x26xbf16>
    %23 = vector.extract_strided_slice %0 {offsets = [1, 0, 4], sizes = [1, 4, 26], strides = [1, 1, 1]} : vector<2x4x32xbf16> to vector<1x4x26xbf16>
    %24 = vector.shape_cast %23 : vector<1x4x26xbf16> to vector<4x26xbf16>
    %25 = tpu.concatenate %22, %24 in 1 : vector<4x26xbf16>, vector<4x26xbf16> -> vector<4x52xbf16>
    %26 = vector.extract_strided_slice %0 {offsets = [0, 0, 5], sizes = [1, 4, 26], strides = [1, 1, 1]} : vector<2x4x32xbf16> to vector<1x4x26xbf16>
    %27 = vector.shape_cast %26 : vector<1x4x26xbf16> to vector<4x26xbf16>
    %28 = vector.extract_strided_slice %0 {offsets = [1, 0, 5], sizes = [1, 4, 26], strides = [1, 1, 1]} : vector<2x4x32xbf16> to vector<1x4x26xbf16>
    %29 = vector.shape_cast %28 : vector<1x4x26xbf16> to vector<4x26xbf16>
    %30 = tpu.concatenate %27, %29 in 1 : vector<4x26xbf16>, vector<4x26xbf16> -> vector<4x52xbf16>
    %31 = vector.extract_strided_slice %0 {offsets = [0, 0, 6], sizes = [1, 4, 26], strides = [1, 1, 1]} : vector<2x4x32xbf16> to vector<1x4x26xbf16>
    %32 = vector.shape_cast %31 : vector<1x4x26xbf16> to vector<4x26xbf16>
    %33 = vector.extract_strided_slice %0 {offsets = [1, 0, 6], sizes = [1, 4, 26], strides = [1, 1, 1]} : vector<2x4x32xbf16> to vector<1x4x26xbf16>
    %34 = vector.shape_cast %33 : vector<1x4x26xbf16> to vector<4x26xbf16>
    %35 = tpu.concatenate %32, %34 in 1 : vector<4x26xbf16>, vector<4x26xbf16> -> vector<4x52xbf16>
    %cst = arith.constant 1.000000e+00 : bf16
    %36 = vector.broadcast %cst : bf16 to vector<1x52xbf16>
    %37 = tpu.concatenate %5, %10, %15, %20, %25, %30, %35, %36 in 0 : vector<4x52xbf16>, vector<4x52xbf16>, vector<4x52xbf16>, vector<4x52xbf16>, vector<4x52xbf16>, vector<4x52xbf16>, vector<4x52xbf16>, vector<1x52xbf16> -> vector<29x52xbf16>
    %c0_2 = arith.constant 0 : index
    %c0_3 = arith.constant 0 : index
    %38 = vector.load %arg2[%c0_2, %c0_3] : memref<8x29xbf16, #tpu.memory_space<vmem>>, vector<8x29xbf16>
    %cst_4 = arith.constant dense<0.000000e+00> : vector<8x52xf32>
    %39 = tpu.matmul %38, %37, %cst_4 {dimension_numbers = #tpu.dot_dimension_numbers<[1], [0], [0], [1], [0, 0, 1, 1], [], []>} : vector<8x29xbf16>, vector<29x52xbf16>, vector<8x52xf32> -> vector<8x52xf32>
    %cst_5 = arith.constant 0.000000e+00 : f32
    %40 = vector.broadcast %cst_5 : f32 to vector<8x52xf32>
    %41 = arith.maximumf %39, %40 : vector<8x52xf32>
    %42 = arith.truncf %41 : vector<8x52xf32> to vector<8x52xbf16>
    %43 = vector.extract_strided_slice %42 {offsets = [0, 0], sizes = [8, 20], strides = [1, 1]} : vector<8x52xbf16> to vector<8x20xbf16>
    %44 = vector.extract_strided_slice %42 {offsets = [0, 26], sizes = [8, 20], strides = [1, 1]} : vector<8x52xbf16> to vector<8x20xbf16>
    %45 = tpu.concatenate %43, %44 in 1 : vector<8x20xbf16>, vector<8x20xbf16> -> vector<8x40xbf16>
    %46 = vector.extract_strided_slice %42 {offsets = [0, 1], sizes = [8, 20], strides = [1, 1]} : vector<8x52xbf16> to vector<8x20xbf16>
    %47 = vector.extract_strided_slice %42 {offsets = [0, 27], sizes = [8, 20], strides = [1, 1]} : vector<8x52xbf16> to vector<8x20xbf16>
    %48 = tpu.concatenate %46, %47 in 1 : vector<8x20xbf16>, vector<8x20xbf16> -> vector<8x40xbf16>
    %49 = vector.extract_strided_slice %42 {offsets = [0, 2], sizes = [8, 20], strides = [1, 1]} : vector<8x52xbf16> to vector<8x20xbf16>
    %50 = vector.extract_strided_slice %42 {offsets = [0, 28], sizes = [8, 20], strides = [1, 1]} : vector<8x52xbf16> to vector<8x20xbf16>
    %51 = tpu.concatenate %49, %50 in 1 : vector<8x20xbf16>, vector<8x20xbf16> -> vector<8x40xbf16>
    %52 = vector.extract_strided_slice %42 {offsets = [0, 3], sizes = [8, 20], strides = [1, 1]} : vector<8x52xbf16> to vector<8x20xbf16>
    %53 = vector.extract_strided_slice %42 {offsets = [0, 29], sizes = [8, 20], strides = [1, 1]} : vector<8x52xbf16> to vector<8x20xbf16>
    %54 = tpu.concatenate %52, %53 in 1 : vector<8x20xbf16>, vector<8x20xbf16> -> vector<8x40xbf16>
    %55 = vector.extract_strided_slice %42 {offsets = [0, 4], sizes = [8, 20], strides = [1, 1]} : vector<8x52xbf16> to vector<8x20xbf16>
    %56 = vector.extract_strided_slice %42 {offsets = [0, 30], sizes = [8, 20], strides = [1, 1]} : vector<8x52xbf16> to vector<8x20xbf16>
    %57 = tpu.concatenate %55, %56 in 1 : vector<8x20xbf16>, vector<8x20xbf16> -> vector<8x40xbf16>
    %58 = vector.extract_strided_slice %42 {offsets = [0, 5], sizes = [8, 20], strides = [1, 1]} : vector<8x52xbf16> to vector<8x20xbf16>
    %59 = vector.extract_strided_slice %42 {offsets = [0, 31], sizes = [8, 20], strides = [1, 1]} : vector<8x52xbf16> to vector<8x20xbf16>
    %60 = tpu.concatenate %58, %59 in 1 : vector<8x20xbf16>, vector<8x20xbf16> -> vector<8x40xbf16>
    %61 = vector.extract_strided_slice %42 {offsets = [0, 6], sizes = [8, 20], strides = [1, 1]} : vector<8x52xbf16> to vector<8x20xbf16>
    %62 = vector.extract_strided_slice %42 {offsets = [0, 32], sizes = [8, 20], strides = [1, 1]} : vector<8x52xbf16> to vector<8x20xbf16>
    %63 = tpu.concatenate %61, %62 in 1 : vector<8x20xbf16>, vector<8x20xbf16> -> vector<8x40xbf16>
    %cst_6 = arith.constant 1.000000e+00 : bf16
    %64 = vector.broadcast %cst_6 : bf16 to vector<1x40xbf16>
    %65 = tpu.concatenate %45, %48, %51, %54, %57, %60, %63, %64 in 0 : vector<8x40xbf16>, vector<8x40xbf16>, vector<8x40xbf16>, vector<8x40xbf16>, vector<8x40xbf16>, vector<8x40xbf16>, vector<8x40xbf16>, vector<1x40xbf16> -> vector<57x40xbf16>
    %c0_7 = arith.constant 0 : index
    %c0_8 = arith.constant 0 : index
    %66 = vector.load %arg3[%c0_7, %c0_8] : memref<8x57xbf16, #tpu.memory_space<vmem>>, vector<8x57xbf16>
    %cst_9 = arith.constant dense<0.000000e+00> : vector<8x40xf32>
    %67 = tpu.matmul %66, %65, %cst_9 {dimension_numbers = #tpu.dot_dimension_numbers<[1], [0], [0], [1], [0, 0, 1, 1], [], []>} : vector<8x57xbf16>, vector<57x40xbf16>, vector<8x40xf32> -> vector<8x40xf32>
    %cst_10 = arith.constant 0.000000e+00 : f32
    %68 = vector.broadcast %cst_10 : f32 to vector<8x40xf32>
    %69 = arith.maximumf %67, %68 : vector<8x40xf32>
    %70 = vector.extract_strided_slice %69 {offsets = [0, 0], sizes = [8, 20], strides = [1, 1]} : vector<8x40xf32> to vector<8x20xf32>
    %cst_11 = arith.constant 0.000000e+00 : f32
    %71 = vector.broadcast %cst_11 : f32 to vector<8x108xf32>
    %72 = tpu.concatenate %70, %71 in 1 : vector<8x20xf32>, vector<8x108xf32> -> vector<8x128xf32>
    %73 = vector.extract_strided_slice %69 {offsets = [0, 20], sizes = [8, 20], strides = [1, 1]} : vector<8x40xf32> to vector<8x20xf32>
    %cst_12 = arith.constant 0.000000e+00 : f32
    %74 = vector.broadcast %cst_12 : f32 to vector<8x108xf32>
    %75 = tpu.concatenate %73, %74 in 1 : vector<8x20xf32>, vector<8x108xf32> -> vector<8x128xf32>
    %76 = vector.shape_cast %72 : vector<8x128xf32> to vector<1x8x128xf32>
    %77 = vector.shape_cast %75 : vector<8x128xf32> to vector<1x8x128xf32>
    %78 = tpu.concatenate %76, %77 in 0 : vector<1x8x128xf32>, vector<1x8x128xf32> -> vector<2x8x128xf32>
    %c0_13 = arith.constant 0 : index
    %c0_14 = arith.constant 0 : index
    %c0_15 = arith.constant 0 : index
    %79 = vector.load %arg4[%c0_13, %c0_14, %c0_15] : memref<2x8x128xf32, #tpu.memory_space<vmem>>, vector<2x8x128xf32>
    tpu.vector_store %arg4[%c0_13, %c0_14, %c0_15], %78 {strides = array<i32>} : memref<2x8x128xf32, #tpu.memory_space<vmem>>, vector<2x8x128xf32>,
    return
  }
  func.func @transform_0(%arg0: i32) -> (i32, i32, i32) {
    %c0_i32 = arith.constant 0 : i32
    %c0_i32_0 = arith.constant 0 : i32
    %c0_i32_1 = arith.constant 0 : i32
    return %arg0, %c0_i32, %c0_i32_0 : i32, i32, i32
  }
  func.func @transform_1(%arg0: i32) -> (i32, i32) {
    %c0_i32 = arith.constant 0 : i32
    %c0_i32_0 = arith.constant 0 : i32
    %c0_i32_1 = arith.constant 0 : i32
    return %c0_i32, %c0_i32_0 : i32, i32
  }
  func.func @transform_2(%arg0: i32) -> (i32, i32) {
    %c0_i32 = arith.constant 0 : i32
    %c0_i32_0 = arith.constant 0 : i32
    %c0_i32_1 = arith.constant 0 : i32
    return %c0_i32, %c0_i32_0 : i32, i32
  }
  func.func @transform_3(%arg0: i32) -> (i32, i32, i32) {
    %c0_i32 = arith.constant 0 : i32
    %c0_i32_0 = arith.constant 0 : i32
    %c0_i32_1 = arith.constant 0 : i32
    return %arg0, %c0_i32, %c0_i32_0 : i32, i32, i32
  }
}

</mosaic_0001>

<llo_original>
// kernel: tpu_custom_call.1
$region0: #{tpu_custom_call.1}
  #allocation0 [shape = 'u32[]', space=smem, size = 0x4, offset = 0x4, fixed_abs, tag = 'smem constant byte address 0x4 - core index']
  #allocation1 [shape = 'u32[72,128]{1,0:T(1,128)}', space=vmem, size = 0x9000, scoped, tag = 'internal scratch']
  %s0 = inlined_call_operand.hbm [shape: bf16[2,4,32], index: 0, kind: input, shape index: {}]
  %s1 = inlined_call_operand.hbm [shape: bf16[8,29], index: 1, kind: input, shape index: {}]
  %s2 = inlined_call_operand.hbm [shape: bf16[8,57], index: 2, kind: input, shape index: {}]
  %s3 = inlined_call_operand.hbm [shape: f32[2,8,128], index: 3, kind: output, shape index: {}]
  %s4 = sld [smem:[#allocation0]]
  $region34: #{tpu_custom_call.1} parent=0
    _
  %s6 = ssub.s32 1, %s4
  %s7 = scalar_select 0, %s6, %s4
  $region1: #{tpu_custom_call.1} parent=0
    #allocation2 [shape = 'u8[2048]{0}', space=vmem, size = 0x800, scoped, tag = 'input window, operand 0, single buffered']
    #allocation3 [shape = 's32[1]{0}', space=sflag, size = 0x4, scoped, tag = 'scoped memory for tpu_custom_call.1']
    #allocation4 [shape = 's32[1]{0}', space=sflag, size = 0x4, scoped, tag = 'scoped memory for tpu_custom_call.1']
    #allocation5 [shape = 'u8[2048]{0}', space=vmem, size = 0x800, scoped, tag = 'input window, operand 1, single buffered']
    #allocation6 [shape = 's32[1]{0}', space=sflag, size = 0x4, scoped, tag = 'scoped memory for tpu_custom_call.1']
    #allocation7 [shape = 'u8[2048]{0}', space=vmem, size = 0x800, scoped, tag = 'input window, operand 2, single buffered']
    #allocation8 [shape = 'u8[8192]{0}', space=vmem, size = 0x2000, scoped, tag = 'output window, operand 0, single buffered']
    %8 = vsyncpa [#allocation3], 0
    %9 = vsyncpa [#allocation6], 0
    %10 = vsyncpa [#allocation4], 0
    // Predicated region
    $region2: #{tpu_custom_call.1} parent=1 // pred_check
      _
    $region3: #{tpu_custom_call.1} parent=1 // pred_check_branch
      %12 = sbr.rel (0) target = $region5
    $region4: #{tpu_custom_call.1} parent=1 // pred_region
      %14 = vsyncadd [#allocation3], 0
      %s15 = sshll.u32 %s0, 4
      %s16 = int_to_ptr.hbm [resolvable:$true] %s15
      %s17 = sshll.u32 [#allocation2], 4
      %s18 = int_to_ptr.vmem [resolvable:$true] %s17
      %23 = dma.hbm_to_vmem [thread:$0]  %s16, 64, %s18, [#allocation3], 32, 32, 2
    $region5: #{tpu_custom_call.1} parent=1 // pred_fallthru
      _
    // Predicated region
    $region6: #{tpu_custom_call.1} parent=1 // pred_check
      _
    $region7: #{tpu_custom_call.1} parent=1 // pred_check_branch
      %25 = sbr.rel (0) target = $region9
    $region8: #{tpu_custom_call.1} parent=1 // pred_region
      %27 = vsyncadd [#allocation6], 0
      %s29 = sshll.u32 %s1, 4
      %s30 = int_to_ptr.hbm [resolvable:$true] %s29
      %s31 = sshll.u32 [#allocation5], 4
      %s32 = int_to_ptr.vmem [resolvable:$true] %s31
      %34 = dma.hbm_to_vmem [thread:$0]  %s30, 64, %s32, [#allocation6]
    $region9: #{tpu_custom_call.1} parent=1 // pred_fallthru
      _
    // Predicated region
    $region10: #{tpu_custom_call.1} parent=1 // pred_check
      _
    $region11: #{tpu_custom_call.1} parent=1 // pred_check_branch
      %36 = sbr.rel (0) target = $region13
    $region12: #{tpu_custom_call.1} parent=1 // pred_region
      %38 = vsyncadd [#allocation6], 0
      %s40 = sshll.u32 %s2, 4
      %s41 = int_to_ptr.hbm [resolvable:$true] %s40
      %s42 = sshll.u32 [#allocation7], 4
      %s43 = int_to_ptr.vmem [resolvable:$true] %s42
      %45 = dma.hbm_to_vmem [thread:$0]  %s41, 64, %s43, [#allocation6]
    $region13: #{tpu_custom_call.1} parent=1 // pred_fallthru
      _
    // Predicated region
    $region14: #{tpu_custom_call.1} parent=1 // pred_check
      _
    $region15: #{tpu_custom_call.1} parent=1 // pred_check_branch
      %47 = sbr.rel (0) target = $region17
    $region16: #{tpu_custom_call.1} parent=1 // pred_region
      %49 = dma.done [#allocation3], 64
    $region17: #{tpu_custom_call.1} parent=1 // pred_fallthru
      _
    // Predicated region
    $region18: #{tpu_custom_call.1} parent=1 // pred_check
      _
    $region19: #{tpu_custom_call.1} parent=1 // pred_check_branch
      %51 = sbr.rel (0) target = $region21
    $region20: #{tpu_custom_call.1} parent=1 // pred_region
      %53 = dma.done [#allocation6], 64
    $region21: #{tpu_custom_call.1} parent=1 // pred_fallthru
      _
    // Predicated region
    $region22: #{tpu_custom_call.1} parent=1 // pred_check
      _
    $region23: #{tpu_custom_call.1} parent=1 // pred_check_branch
      %55 = sbr.rel (0) target = $region25
    $region24: #{tpu_custom_call.1} parent=1 // pred_region
      %57 = dma.done [#allocation6], 64
    $region25: #{tpu_custom_call.1} parent=1 // pred_fallthru
      _
    %v60 = vld [vmem:[#allocation2] sm:$0x3]
    %v61 = vld [vmem:[#allocation2 + $0x2] sm:$0x3]
    %63 = vst [vmem:[#allocation1] ss:$4 sm:$0xff] %v61
    %v64 = vld.sshfl [vmem:[#allocation1] sm:$0xff pattern:$0x73625140]
    %66 = vrot.lane.b32.xlu0 %v64, 26
    %v67 = vpop.permute.xlu0 %66
    %vm68 = vcmask 211968
    %v71 = vsel %vm68, %v60, %v67
    %72 = vst [vmem:[#allocation1] ss:$4 sm:$0xff] %v60
    %v73 = vld.sshfl [vmem:[#allocation1] sm:$0xff pattern:$0x73625140]
    %75 = vrot.lane.b32.xlu0 %v73, 127
    %v76 = vpop.permute.xlu0 %75
    %77 = vst [vmem:[#allocation1] ss:$4 sm:$0xff] %v61
    %v78 = vld.sshfl [vmem:[#allocation1] sm:$0xff pattern:$0x73625140]
    %80 = vrot.lane.b32.xlu0 %v78, 25
    %v81 = vpop.permute.xlu0 %80
    %v84 = vsel %vm68, %v76, %v81
    %85 = vst [vmem:[#allocation1] ss:$4 sm:$0xff] %v60
    %v86 = vld.sshfl [vmem:[#allocation1] sm:$0xff pattern:$0x73625140]
    %88 = vrot.lane.b32.xlu0 %v86, 126
    %v89 = vpop.permute.xlu0 %88
    %90 = vst [vmem:[#allocation1] ss:$4 sm:$0xff] %v61
    %v91 = vld.sshfl [vmem:[#allocation1] sm:$0xff pattern:$0x73625140]
    %93 = vrot.lane.b32.xlu0 %v91, 24
    %v94 = vpop.permute.xlu0 %93
    %v97 = vsel %vm68, %v89, %v94
    %98 = vst [vmem:[#allocation1] ss:$4 sm:$0xff] %v60
    %v99 = vld.sshfl [vmem:[#allocation1] sm:$0xff pattern:$0x73625140]
    %101 = vrot.lane.b32.xlu0 %v99, 125
    %v102 = vpop.permute.xlu0 %101
    %103 = vst [vmem:[#allocation1] ss:$4 sm:$0xff] %v61
    %v104 = vld.sshfl [vmem:[#allocation1] sm:$0xff pattern:$0x73625140]
    %106 = vrot.lane.b32.xlu0 %v104, 23
    %v107 = vpop.permute.xlu0 %106
    %v110 = vsel %vm68, %v102, %v107
    %111 = vst [vmem:[#allocation1] ss:$4 sm:$0xff] %v60
    %v112 = vld.sshfl [vmem:[#allocation1] sm:$0xff pattern:$0x73625140]
    %114 = vrot.lane.b32.xlu0 %v112, 124
    %v115 = vpop.permute.xlu0 %114
    %116 = vst [vmem:[#allocation1] ss:$4 sm:$0xff] %v61
    %v117 = vld.sshfl [vmem:[#allocation1] sm:$0xff pattern:$0x73625140]
    %119 = vrot.lane.b32.xlu0 %v117, 22
    %v120 = vpop.permute.xlu0 %119
    %v123 = vsel %vm68, %v115, %v120
    %124 = vst [vmem:[#allocation1] ss:$4 sm:$0xff] %v60
    %v125 = vld.sshfl [vmem:[#allocation1] sm:$0xff pattern:$0x73625140]
    %127 = vrot.lane.b32.xlu0 %v125, 123
    %v128 = vpop.permute.xlu0 %127
    %129 = vst [vmem:[#allocation1] ss:$4 sm:$0xff] %v61
    %v130 = vld.sshfl [vmem:[#allocation1] sm:$0xff pattern:$0x73625140]
    %132 = vrot.lane.b32.xlu0 %v130, 21
    %v133 = vpop.permute.xlu0 %132
    %v136 = vsel %vm68, %v128, %v133
    %137 = vst [vmem:[#allocation1] ss:$4 sm:$0xff] %v60
    %v138 = vld.sshfl [vmem:[#allocation1] sm:$0xff pattern:$0x73625140]
    %140 = vrot.lane.b32.xlu0 %v138, 122
    %v141 = vpop.permute.xlu0 %140
    %142 = vst [vmem:[#allocation1] ss:$4 sm:$0xff] %v61
    %v143 = vld.sshfl [vmem:[#allocation1] sm:$0xff pattern:$0x73625140]
    %145 = vrot.lane.b32.xlu0 %v143, 20
    %v146 = vpop.permute.xlu0 %145
    %v149 = vsel %vm68, %v141, %v146
    %v151 = vrot.slane %v84, 6
    %v153 = vrot.slane %v97, 4
    %v155 = vrot.slane %v110, 2
    %v157 = vrot.slane %v136, 6
    %v159 = vrot.slane %v149, 4
    %vm160 = vcmask 1041408
    %v162 = vsel %vm160, %v71, %v151
    %vm163 = vcmask 1043456
    %v165 = vsel %vm163, %v162, %v153
    %vm166 = vcmask 1045504
    %v168 = vsel %vm166, %v165, %v155
    %v171 = vsel %vm160, %v123, %v157
    %v173 = vsel %vm163, %v171, %v159
    %v175 = vsel %vm166, %v173, 1065369472
    %v176 = vld [vmem:[#allocation5] sm:$0xf]
    %vm177 = vcmask 236544
    %v179 = vsel %vm177, %v176, 0
    %vm181 = vcmask 1046528
    %v182 = vsel %vm166, 4294967295, 65535
    %v183 = vsel %vm181, %v182, 0
    %v184 = vand.u32 %v175, %v183
    %186 = vmatpush.bf16.msra.mxu0 0
    %187 = vmatpush.bf16.msra.mxu0 0
    %188 = vmatpush.bf16.msra.mxu0 0
    %189 = vmatpush.bf16.msra.mxu0 0
    %190 = vmatpush.bf16.msra.mxu0 0
    %191 = vmatpush.bf16.msra.mxu0 0
    %192 = vmatpush.bf16.msra.mxu0 %v184
    %193 = vmatpush.bf16.msra.mxu0 %v168
    %194 = vmatmul.bf16.gmra.mxu0 %v179
    %v195 = vpop.f32.mrf.mxu0
    %v196 = vadd.f32 0.0, %v195
    %v197 = vpop.f32.mrf.mxu0
    %198 = vdwg.mxu0
    %v199 = vmax.f32 %v196, 0.0
    %v200 = vpack.c.bf16 %v199, %v199
    %v202 = vunpack.c.l.b16 %v200
    %v203 = vpack.c.b16 %v202, %v202
    %204 = vrot.lane.b32.xlu0 %v203, 122
    %v205 = vpop.permute.xlu0 %204
    %vm206 = vcmask 162816
    %v209 = vsel %vm206, %v200, %v205
    %210 = vrot.lane.b32.xlu0 %v203, 127
    %v211 = vpop.permute.xlu0 %210
    %212 = vrot.lane.b32.xlu0 %v203, 121
    %v213 = vpop.permute.xlu0 %212
    %v216 = vsel %vm206, %v211, %v213
    %217 = vrot.lane.b32.xlu0 %v203, 126
    %v218 = vpop.permute.xlu0 %217
    %219 = vrot.lane.b32.xlu0 %v203, 120
    %v220 = vpop.permute.xlu0 %219
    %v223 = vsel %vm206, %v218, %v220
    %224 = vrot.lane.b32.xlu0 %v203, 125
    %v225 = vpop.permute.xlu0 %224
    %226 = vrot.lane.b32.xlu0 %v203, 119
    %v227 = vpop.permute.xlu0 %226
    %v230 = vsel %vm206, %v225, %v227
    %231 = vrot.lane.b32.xlu0 %v203, 124
    %v232 = vpop.permute.xlu0 %231
    %233 = vrot.lane.b32.xlu0 %v203, 118
    %v234 = vpop.permute.xlu0 %233
    %v237 = vsel %vm206, %v232, %v234
    %238 = vrot.lane.b32.xlu0 %v203, 123
    %v239 = vpop.permute.xlu0 %238
    %240 = vrot.lane.b32.xlu0 %v203, 117
    %v241 = vpop.permute.xlu0 %240
    %v244 = vsel %vm206, %v239, %v241
    %245 = vrot.lane.b32.xlu0 %v203, 116
    %v246 = vpop.permute.xlu0 %245
    %v248 = vsel %vm206, %v205, %v246
    %v250 = vrot.slane %v216, 4
    %v252 = vrot.slane %v230, 4
    %v254 = vrot.slane %v244, 4
    %v256 = vsel %vm163, %v209, %v250
    %v259 = vsel %vm163, %v223, %v252
    %v262 = vsel %vm163, %v237, %v254
    %v264 = vsel %vm163, %v248, 1065369472
    %v265 = vld [vmem:[#allocation7] sm:$0xf]
    %vm266 = vcmask 465920
    %v268 = vsel %vm266, %v265, 0
    %vm270 = vcmask 1044480
    %v271 = vsel %vm163, 4294967295, 65535
    %v272 = vsel %vm270, %v271, 0
    %v273 = vand.u32 %v264, %v272
    %275 = vmatpush.bf16.msra.mxu0 0
    %276 = vmatpush.bf16.msra.mxu0 0
    %277 = vmatpush.bf16.msra.mxu0 0
    %278 = vmatpush.bf16.msra.mxu0 0
    %279 = vmatpush.bf16.msra.mxu0 %v273
    %280 = vmatpush.bf16.msra.mxu0 %v262
    %281 = vmatpush.bf16.msra.mxu0 %v259
    %282 = vmatpush.bf16.msra.mxu0 %v256
    %283 = vmatmul.bf16.gmra.mxu0 %v268
    %v284 = vpop.f32.mrf.mxu0
    %v285 = vadd.f32 0.0, %v284
    %v286 = vpop.f32.mrf.mxu0
    %287 = vdwg.mxu0
    %v288 = vmax.f32 %v285, 0.0
    %v289 = vsel %vm206, %v288, 0.0
    %291 = vrot.lane.b32.xlu0 %v288, 108
    %v292 = vpop.permute.xlu0 %291
    %v294 = vsel %vm206, %v292, 0.0
    %295 = vst [vmem:[#allocation8] sm:$0xff] %v289
    %296 = vst [vmem:[#allocation8 + $0x8] sm:$0xff] %v294
    // Predicated region
    $region26: #{tpu_custom_call.1} parent=1 // pred_check
      _
    $region27: #{tpu_custom_call.1} parent=1 // pred_check_branch
      %298 = sbr.rel (0) target = $region29
    $region28: #{tpu_custom_call.1} parent=1 // pred_region
      %300 = vsyncadd [#allocation4], 0
      %s301 = sshll.u32 [#allocation8], 4
      %s302 = int_to_ptr.vmem [resolvable:$true] %s301
      %s303 = sshll.u32 %s3, 4
      %s304 = int_to_ptr.hbm [resolvable:$true] %s303
      %309 = dma.vmem_to_hbm [thread:$0]  %s302, 256, %s304, [#allocation4], 128, 128, 8
    $region29: #{tpu_custom_call.1} parent=1 // pred_fallthru
      _
    // Predicated region
    $region30: #{tpu_custom_call.1} parent=1 // pred_check
      _
    $region31: #{tpu_custom_call.1} parent=1 // pred_check_branch
      %311 = sbr.rel (0) target = $region33
    $region32: #{tpu_custom_call.1} parent=1 // pred_region
      %313 = dma.done [#allocation4], 256
    $region33: #{tpu_custom_call.1} parent=1 // pred_fallthru
      _
    %314 = vsyncpa [#allocation3], 1
    %315 = vsyncpa [#allocation6], 1
    %316 = vsyncpa [#allocation4], 1

</llo_original>
